<compile_context>
chip_gen: v6e
topology: v6e:2x2x1
jax: 0.10.0
libtpu: 0.0.40
codegen_flags: <defaults>
</compile_context>

<pallas_src>
import jax
import jax.numpy as jnp
from jax.experimental import pallas as pl
from jax.experimental.pallas import tpu as pltpu


_SQRT_2_OVER_PI = 0.7978845608028654


def _gelu_openai(x):
    # OpenAI / CogView tanh-approx GELU, computed in f32 (tanh goes to the EUP
    # slot; f32 epilogue avoids bf16 VPU/EUP paths v5e doesn't have).
    return 0.5 * x * (1.0 + jnp.tanh(_SQRT_2_OVER_PI * x * (1.0 + 0.044715 * x * x)))


# ----------------------------------------------------------------------------
# Fused MLP kernel: gelu(x @ W1 + b1) @ W2 + b2, 4h intermediate kept in VMEM
# ----------------------------------------------------------------------------
def _make_mlp_kernel(tf):
    def kernel(x_ref, w1_ref, b1_ref, w2_ref, b2_ref, o_ref, acc_ref):
        # grid = (M_pad // tm, F // tf).  Axis 1 (the 4h axis) is the
        # contraction axis of dense_4h_to_h -> "arbitrary"; the output tile /
        # acc scratch is resident across it (patterns P1 + P3).
        f = pl.program_id(1)

        @pl.when(f == 0)
        def _init():
            acc_ref[...] = jnp.zeros_like(acc_ref)

        # dense_h_to_4h slice: (tm, H) @ (H, tf) -> (tm, tf), f32 on the MXU.
        h = jnp.dot(x_ref[...], w1_ref[...], preferred_element_type=jnp.float32)
        # b1 is fully resident; slice the tf-wide chunk for this grid step.
        off = pl.multiple_of(f * tf, tf)
        h = h + b1_ref[:, pl.ds(off, tf)].astype(jnp.float32)
        h = _gelu_openai(h)

        # dense_4h_to_h partial product: (tm, tf) @ (tf, H), accumulated over f.
        acc_ref[...] += jnp.dot(h.astype(w2_ref.dtype), w2_ref[...],
                                preferred_element_type=jnp.float32)

        @pl.when(f == pl.num_programs(1) - 1)
        def _finalize():
            # Second bias added once, in the epilogue, off the k-loop critical path.
            o_ref[...] = (acc_ref[...] + b2_ref[...].astype(jnp.float32)
                          ).astype(o_ref.dtype)

    return kernel


# ----------------------------------------------------------------------------
# Tile selection / VMEM budgeting
# ----------------------------------------------------------------------------
def _round_up(x, m):
    return ((x + m - 1) // m) * m


def _vmem_footprint(tm, tf, H, F, in_it, w_it, out_it):
    # Double-buffered input/output blocks + single f32 accumulator.
    return (2 * tm * H * in_it      # x row tile
            + 2 * H * tf * w_it     # W1 column tile
            + 2 * tf * H * w_it     # W2 row tile
            + 2 * F * 4             # b1 (resident, f32)
            + 2 * H * 4             # b2 (resident, f32)
            + 2 * tm * H * out_it   # output tile
            + tm * H * 4)           # f32 accumulator scratch


def _select_tiles(M, H, F, in_it, w_it, out_it, *, tm_cap, vmem_budget_bytes):
    sublane = 16 if in_it < 4 else 8
    tf_cands = [t for t in (512, 256, 128) if F % t == 0] or [F]

    tm = min(tm_cap, _round_up(M, sublane))
    tf = tf_cands[0]
    while _vmem_footprint(tm, tf, H, F, in_it, w_it, out_it) > vmem_budget_bytes:
        shrunk = False
        for cand in tf_cands:
            if cand < tf:
                tf, shrunk = cand, True
                break
        if shrunk:
            continue
        if tm > sublane:
            tm = max(sublane, _round_up(tm // 2, sublane))
        else:
            break

    # Megacore (v7x, 2 TCs): keep at least 2 tiles on the parallel i-axis for
    # non-trivial M so half the chip isn't idle.
    if M > 256 and _round_up(M, tm) == tm:
        tm = max(sublane, _round_up((M + 1) // 2, sublane))

    return tm, tf


# ----------------------------------------------------------------------------
# Wrapper: y = gelu(x2d @ w1 + b1) @ w2 + b2
# ----------------------------------------------------------------------------
def gpt2_parallel_mlp(x2d, w1, b1, w2, b2, *, tm=None, tf=None,
                      vmem_budget_bytes=40 * 1024 * 1024):
    """Fused GPT2 MLP.  x2d: [M, H]; w1: [H, 4H]; b1: [4H]; w2: [4H, H]; b2: [H].

    Weights are stored as [in, out] (transpose of PyTorch's [out, in]) so the
    kernel computes x @ W directly.
    """
    M, H = x2d.shape
    H1, F = w1.shape
    F2, H2 = w2.shape
    assert H == H1 and H == H2 and F == F2, "shape mismatch"

    in_it = x2d.dtype.itemsize
    w_it = w1.dtype.itemsize
    out_it = x2d.dtype.itemsize

    auto_tm, auto_tf = _select_tiles(M, H, F, in_it, w_it, out_it,
                                     tm_cap=512,
                                     vmem_budget_bytes=vmem_budget_bytes)
    if tm is None:
        tm = auto_tm
    if tf is None:
        tf = auto_tf
    assert F % tf == 0, "tf must divide 4H"

    # Pad rows to a multiple of tm (tm is already sublane-aligned).
    M_pad = _round_up(M, tm)
    x_pad = x2d if M_pad == M else jnp.pad(x2d, ((0, M_pad - M), (0, 0)))

    b1_2d = b1.reshape(1, F).astype(jnp.float32)
    b2_2d = b2.reshape(1, H).astype(jnp.float32)

    grid = (M_pad // tm, F // tf)
    n_row_tiles = grid[0]

    # Weights are re-streamed from HBM for every row tile.
    flops = 4 * M_pad * H * F                       # two matmuls
    bytes_accessed = (x_pad.size * in_it
                      + n_row_tiles * (w1.size + w2.size) * w_it
                      + F * 4 + H * 4
                      + M_pad * H * out_it)

    footprint = _vmem_footprint(tm, tf, H, F, in_it, w_it, out_it)
    # Headroom above the pipelined footprint, but stay under v7x's 64 MiB phys.
    vmem_limit = min(60 * 1024 * 1024, max(int(footprint * 5 // 4), 32 * 1024 * 1024))

    out = pl.pallas_call(
        _make_mlp_kernel(tf),
        out_shape=jax.ShapeDtypeStruct((M_pad, H), x2d.dtype),
        grid=grid,
        in_specs=[
            pl.BlockSpec((tm, H), lambda i, f: (i, 0)),   # x row tile (resident over f)
            pl.BlockSpec((H, tf), lambda i, f: (0, f)),   # W1 column tile
            pl.BlockSpec((1, F), lambda i, f: (0, 0)),    # b1 fully resident
            pl.BlockSpec((tf, H), lambda i, f: (f, 0)),   # W2 row tile
            pl.BlockSpec((1, H), lambda i, f: (0, 0)),    # b2 resident
        ],
        out_specs=pl.BlockSpec((tm, H), lambda i, f: (i, 0)),
        scratch_shapes=[pltpu.VMEM((tm, H), jnp.float32)],   # f32 output accumulator
        compiler_params=pltpu.CompilerParams(
            # M tiles independent -> parallel (megacore on v7x); the 4h axis
            # carries the accumulator -> arbitrary.
            dimension_semantics=("parallel", "arbitrary"),
            vmem_limit_bytes=vmem_limit,
        ),
        cost_estimate=pl.CostEstimate(
            flops=flops,
            transcendentals=M_pad * F,          # one tanh per 4h activation
            bytes_accessed=bytes_accessed,
        ),
    )(x_pad, w1, b1_2d, w2, b2_2d)

    return out if M_pad == M else out[:M]


# ----------------------------------------------------------------------------
# Module wrapper (forward-pass semantics of GPT2ParallelMLP, world_size == 1)
# ----------------------------------------------------------------------------
class GPT2ParallelMLPPallas:
    """JAX/Pallas analogue of CogView's GPT2ParallelMLP on a single MP rank.

    Set compute_dtype=jnp.bfloat16 for a bf16 MXU datapath (f32 accumulation is
    preserved inside the kernel); default keeps the parameter dtype.
    """

    def __init__(self, params, output_dropout_prob=0.0, compute_dtype=None):
        self.params = params
        self.output_dropout_prob = output_dropout_prob
        self.compute_dtype = compute_dtype
        # TODO(synk): multi-rank model parallelism (forward all-reduce of the
        # row-parallel output) has no single-device equivalent; world_size==1 here.

    def __call__(self, hidden_states):
        orig_shape = hidden_states.shape
        H = orig_shape[-1]
        x2d = hidden_states.reshape(-1, H)
        w1, w2 = self.params["w1"], self.params["w2"]
        if self.compute_dtype is not None:
            x2d = x2d.astype(self.compute_dtype)
            w1 = w1.astype(self.compute_dtype)
            w2 = w2.astype(self.compute_dtype)
        y2d = gpt2_parallel_mlp(x2d, w1, self.params["b1"], w2, self.params["b2"])
        y2d = y2d.astype(hidden_states.dtype)
        # TODO(synk): torch.nn.Dropout applied in inference mode (identity);
        # training-mode dropout would use pltpu.prng_seed + stateful_bernoulli.
        return y2d.reshape(orig_shape)


# ----------------------------------------------------------------------------
# Driver
# ----------------------------------------------------------------------------
if __name__ == "__main__":
    key = jax.random.PRNGKey(0)
    k_x, k_w1, k_b1, k_w2, k_b2 = jax.random.split(key, 5)

    batch, seq, hidden = 2, 8, 128
    four_h = 4 * hidden

    x = jax.random.normal(k_x, (batch, seq, hidden), dtype=jnp.float32)
    # Parameters stored as [in, out]; small random biases to exercise the adds
    # (the module zero-inits biases, but forward semantics are identical).
    w1 = jax.random.normal(k_w1, (hidden, four_h), dtype=jnp.float32) * 0.02
    b1 = jax.random.normal(k_b1, (four_h,), dtype=jnp.float32) * 0.02
    w2 = jax.random.normal(k_w2, (four_h, hidden), dtype=jnp.float32) * 0.02
    b2 = jax.random.normal(k_b2, (hidden,), dtype=jnp.float32) * 0.02

    mlp = GPT2ParallelMLPPallas(
        {"w1": w1, "b1": b1, "w2": w2, "b2": b2}, output_dropout_prob=0.0
    )

    y = mlp(x)
    y = jax.block_until_ready(y)

    # Pure-JAX reference of the same forward (dense_h_to_4h -> gelu -> dense_4h_to_h).
    x2d = x.reshape(-1, hidden)
    h_ref = x2d @ w1 + b1
    h_ref = 0.5 * h_ref * (1.0 + jnp.tanh(
        0.7978845608028654 * h_ref * (1.0 + 0.044715 * h_ref * h_ref)))
    y_ref = (h_ref @ w2 + b2).reshape(x.shape)

    assert y.shape == x.shape
    assert jnp.allclose(y, y_ref, atol=1e-4, rtol=1e-4), "mismatch vs reference"

    print("KERNEL_OK")
</pallas_src>

<mosaic_0001>
module attributes {stable_mosaic.version = 11 : i64} {
  func.func @kernel(%arg0: i32, %arg1: i32, %arg2: memref<16x128xf32, #tpu.memory_space<vmem>>, %arg3: memref<128x512xf32, #tpu.memory_space<vmem>>, %arg4: memref<1x512xf32, #tpu.memory_space<vmem>>, %arg5: memref<512x128xf32, #tpu.memory_space<vmem>>, %arg6: memref<1x128xf32, #tpu.memory_space<vmem>>, %arg7: memref<16x128xf32, #tpu.memory_space<vmem>>, %arg8: memref<16x128xf32, #tpu.memory_space<vmem>>) attributes {dimension_semantics = [#tpu.dimension_semantics<parallel>, #tpu.dimension_semantics<arbitrary>], iteration_bounds = array<i64: 1, 1>, scalar_prefetch = 0 : i64, scratch_operands = 1 : i64, tpu.core_type = #tpu.core_type<tc>, window_params = [{transform_indices = @transform_0, window_bounds = array<i64: 16, 128>}, {transform_indices = @transform_1, window_bounds = array<i64: 128, 512>}, {pipeline_mode = #tpu.pipeline_mode<synchronous>, transform_indices = @transform_2, window_bounds = array<i64: 1, 512>}, {transform_indices = @transform_3, window_bounds = array<i64: 512, 128>}, {pipeline_mode = #tpu.pipeline_mode<synchronous>, transform_indices = @transform_4, window_bounds = array<i64: 1, 128>}, {transform_indices = @transform_5, window_bounds = array<i64: 16, 128>}]} {
    %c0_i32 = arith.constant 0 : i32
    %0 = arith.cmpi eq, %arg1, %c0_i32 : i32
    %1 = arith.extui %0 : i1 to i32
    %c0_i32_0 = arith.constant 0 : i32
    %2 = arith.cmpi ne, %1, %c0_i32_0 : i32
    scf.if %2 {
      %cst_19 = arith.constant 0.000000e+00 : f32
      %34 = vector.broadcast %cst_19 : f32 to vector<16x128xf32>
      %c0_20 = arith.constant 0 : index
      %c0_21 = arith.constant 0 : index
      %35 = vector.load %arg8[%c0_20, %c0_21] : memref<16x128xf32, #tpu.memory_space<vmem>>, vector<16x128xf32>
      tpu.vector_store %arg8[%c0_20, %c0_21], %34 {strides = array<i32>} : memref<16x128xf32, #tpu.memory_space<vmem>>, vector<16x128xf32>,
    } else {
    }
    %c0 = arith.constant 0 : index
    %c0_1 = arith.constant 0 : index
    %3 = vector.load %arg2[%c0, %c0_1] : memref<16x128xf32, #tpu.memory_space<vmem>>, vector<16x128xf32>
    %c0_2 = arith.constant 0 : index
    %c0_3 = arith.constant 0 : index
    %4 = vector.load %arg3[%c0_2, %c0_3] : memref<128x512xf32, #tpu.memory_space<vmem>>, vector<128x512xf32>
    %cst = arith.constant dense<0.000000e+00> : vector<16x512xf32>
    %5 = tpu.matmul %3, %4, %cst {dimension_numbers = #tpu.dot_dimension_numbers<[1], [0], [0], [1], [0, 0, 1, 1], [], []>} : vector<16x128xf32>, vector<128x512xf32>, vector<16x512xf32> -> vector<16x512xf32>
    %c512_i32 = arith.constant 512 : i32
    %6 = arith.muli %arg1, %c512_i32 : i32
    %7 = tpu.assume_multiple %6, 512 : i32
    %c0_4 = arith.constant 0 : index
    %8 = arith.index_cast %7 : i32 to index
    %9 = vector.load %arg4[%c0_4, %8] : memref<1x512xf32, #tpu.memory_space<vmem>>, vector<1x512xf32>
    %10 = vector.broadcast %9 : vector<1x512xf32> to vector<16x512xf32>
    %11 = arith.addf %5, %10 : vector<16x512xf32>
    %cst_5 = arith.constant 5.000000e-01 : f32
    %12 = vector.broadcast %cst_5 : f32 to vector<16x512xf32>
    %13 = arith.mulf %12, %11 : vector<16x512xf32>
    %cst_6 = arith.constant 0.797884583 : f32
    %14 = vector.broadcast %cst_6 : f32 to vector<16x512xf32>
    %15 = arith.mulf %14, %11 : vector<16x512xf32>
    %cst_7 = arith.constant 4.471500e-02 : f32
    %16 = vector.broadcast %cst_7 : f32 to vector<16x512xf32>
    %17 = arith.mulf %16, %11 : vector<16x512xf32>
    %18 = arith.mulf %17, %11 : vector<16x512xf32>
    %cst_8 = arith.constant 1.000000e+00 : f32
    %19 = vector.broadcast %cst_8 : f32 to vector<16x512xf32>
    %20 = arith.addf %19, %18 : vector<16x512xf32>
    %21 = arith.mulf %15, %20 : vector<16x512xf32>
    %22 = math.tanh %21 : vector<16x512xf32>
    %cst_9 = arith.constant 1.000000e+00 : f32
    %23 = vector.broadcast %cst_9 : f32 to vector<16x512xf32>
    %24 = arith.addf %23, %22 : vector<16x512xf32>
    %25 = arith.mulf %13, %24 : vector<16x512xf32>
    %c0_10 = arith.constant 0 : index
    %c0_11 = arith.constant 0 : index
    %26 = vector.load %arg8[%c0_10, %c0_11] : memref<16x128xf32, #tpu.memory_space<vmem>>, vector<16x128xf32>
    %c0_12 = arith.constant 0 : index
    %c0_13 = arith.constant 0 : index
    %27 = vector.load %arg5[%c0_12, %c0_13] : memref<512x128xf32, #tpu.memory_space<vmem>>, vector<512x128xf32>
    %cst_14 = arith.constant dense<0.000000e+00> : vector<16x128xf32>
    %28 = tpu.matmul %25, %27, %cst_14 {dimension_numbers = #tpu.dot_dimension_numbers<[1], [0], [0], [1], [0, 0, 1, 1], [], []>} : vector<16x512xf32>, vector<512x128xf32>, vector<16x128xf32> -> vector<16x128xf32>
    %29 = arith.addf %26, %28 : vector<16x128xf32>
    %c0_15 = arith.constant 0 : index
    %c0_16 = arith.constant 0 : index
    %30 = vector.load %arg8[%c0_15, %c0_16] : memref<16x128xf32, #tpu.memory_space<vmem>>, vector<16x128xf32>
    tpu.vector_store %arg8[%c0_15, %c0_16], %29 {strides = array<i32>} : memref<16x128xf32, #tpu.memory_space<vmem>>, vector<16x128xf32>,
    %c0_i32_17 = arith.constant 0 : i32
    %31 = arith.cmpi eq, %arg1, %c0_i32_17 : i32
    %32 = arith.extui %31 : i1 to i32
    %c0_i32_18 = arith.constant 0 : i32
    %33 = arith.cmpi ne, %32, %c0_i32_18 : i32
    scf.if %33 {
      %c0_19 = arith.constant 0 : index
      %c0_20 = arith.constant 0 : index
      %34 = vector.load %arg8[%c0_19, %c0_20] : memref<16x128xf32, #tpu.memory_space<vmem>>, vector<16x128xf32>
      %c0_21 = arith.constant 0 : index
      %c0_22 = arith.constant 0 : index
      %35 = vector.load %arg6[%c0_21, %c0_22] : memref<1x128xf32, #tpu.memory_space<vmem>>, vector<1x128xf32>
      %36 = vector.broadcast %35 : vector<1x128xf32> to vector<16x128xf32>
      %37 = arith.addf %34, %36 : vector<16x128xf32>
      %c0_23 = arith.constant 0 : index
      %c0_24 = arith.constant 0 : index
      %38 = vector.load %arg7[%c0_23, %c0_24] : memref<16x128xf32, #tpu.memory_space<vmem>>, vector<16x128xf32>
      tpu.vector_store %arg7[%c0_23, %c0_24], %37 {strides = array<i32>} : memref<16x128xf32, #tpu.memory_space<vmem>>, vector<16x128xf32>,
    } else {
    }
    return
  }
  func.func @transform_0(%arg0: i32, %arg1: i32) -> (i32, i32) {
    %c0_i32 = arith.constant 0 : i32
    %c0_i32_0 = arith.constant 0 : i32
    return %arg0, %c0_i32 : i32, i32
  }
  func.func @transform_1(%arg0: i32, %arg1: i32) -> (i32, i32) {
    %c0_i32 = arith.constant 0 : i32
    %c0_i32_0 = arith.constant 0 : i32
    return %c0_i32, %arg1 : i32, i32
  }
  func.func @transform_2(%arg0: i32, %arg1: i32) -> (i32, i32) {
    %c0_i32 = arith.constant 0 : i32
    %c0_i32_0 = arith.constant 0 : i32
    %c0_i32_1 = arith.constant 0 : i32
    return %c0_i32, %c0_i32_0 : i32, i32
  }
  func.func @transform_3(%arg0: i32, %arg1: i32) -> (i32, i32) {
    %c0_i32 = arith.constant 0 : i32
    %c0_i32_0 = arith.constant 0 : i32
    return %arg1, %c0_i32 : i32, i32
  }
  func.func @transform_4(%arg0: i32, %arg1: i32) -> (i32, i32) {
    %c0_i32 = arith.constant 0 : i32
    %c0_i32_0 = arith.constant 0 : i32
    %c0_i32_1 = arith.constant 0 : i32
    return %c0_i32, %c0_i32_0 : i32, i32
  }
  func.func @transform_5(%arg0: i32, %arg1: i32) -> (i32, i32) {
    %c0_i32 = arith.constant 0 : i32
    %c0_i32_0 = arith.constant 0 : i32
    return %arg0, %c0_i32 : i32, i32
  }
}

</mosaic_0001>

<llo_original>
// kernel: tpu_custom_call.1
$region0: #{tpu_custom_call.1}
  #allocation0 [shape = 'u32[]', space=smem, size = 0x4, offset = 0x4, fixed_abs, tag = 'smem constant byte address 0x4 - core index']
  #allocation1 [shape = 'u32[144,128]{1,0:T(1,128)}', space=vmem, size = 0x12000, scoped, tag = 'internal scratch']
  #allocation2 [shape = 'f32[16,128]{1,0:T(8,128)}', space=vmem, size = 0x2000, scoped, tag = 'scratch operand']
  %s0 = inlined_call_operand.hbm [shape: f32[16,128], index: 0, kind: input, shape index: {}]
  %s1 = inlined_call_operand.hbm [shape: f32[128,512], index: 1, kind: input, shape index: {}]
  %s2 = inlined_call_operand.hbm [shape: f32[1,512], index: 2, kind: input, shape index: {}]
  %s3 = inlined_call_operand.hbm [shape: f32[512,128], index: 3, kind: input, shape index: {}]
  %s4 = inlined_call_operand.vmem [shape: f32[1,128], index: 4, kind: input, shape index: {}]
  %s5 = inlined_call_operand.hbm [shape: f32[16,128], index: 5, kind: output, shape index: {}]
  %s6 = sld [smem:[#allocation0]]
  $region54: #{tpu_custom_call.1} parent=0
    _
  %s8 = ssub.s32 1, %s6
  %s9 = scalar_select 0, %s8, %s6
  $region1: #{tpu_custom_call.1} parent=0
    #allocation3 [shape = 'u8[8192]{0}', space=vmem, size = 0x2000, scoped, tag = 'input window, operand 0, single buffered']
    #allocation4 [shape = 's32[1]{0}', space=sflag, size = 0x4, scoped, tag = 'scoped memory for tpu_custom_call.1']
    #allocation5 [shape = 's32[1]{0}', space=sflag, size = 0x4, scoped, tag = 'scoped memory for tpu_custom_call.1']
    #allocation6 [shape = 'u8[262144]{0}', space=vmem, size = 0x40000, scoped, tag = 'input window, operand 1, single buffered']
    #allocation7 [shape = 's32[1]{0}', space=sflag, size = 0x4, scoped, tag = 'scoped memory for tpu_custom_call.1']
    #allocation8 [shape = 'u8[2048]{0}', space=vmem, size = 0x800, scoped, tag = 'input window, operand 2, single buffered']
    #allocation9 [shape = 'u8[262144]{0}', space=vmem, size = 0x40000, scoped, tag = 'input window, operand 3, single buffered']
    #allocation10 [shape = 's32[1]{0}', space=sflag, size = 0x4, scoped, tag = 'scoped memory for tpu_custom_call.1']
    #allocation11 [shape = 'u8[8192]{0}', space=vmem, size = 0x2000, scoped, tag = 'output window, operand 0, single buffered']
    %10 = vsyncpa [#allocation4], 0
    %11 = vsyncpa [#allocation7], 0
    %12 = vsyncpa [#allocation10], 0
    %13 = vsyncpa [#allocation5], 0
    // Predicated region
    $region2: #{tpu_custom_call.1} parent=1 // pred_check
      _
    $region3: #{tpu_custom_call.1} parent=1 // pred_check_branch
      %15 = sbr.rel (0) target = $region5
    $region4: #{tpu_custom_call.1} parent=1 // pred_region
      %s17 = ssub.s32 256, 256
      %18 = vsyncadd [#allocation4], %s17
      %s19 = sshll.u32 [#allocation3], 4
      %s20 = int_to_ptr.vmem [resolvable:$true] %s19
      %25 = dma.hbm_to_vmem [thread:$0]  %s0, 256, %s20, [#allocation4], 128, 128, 8
    $region5: #{tpu_custom_call.1} parent=1 // pred_fallthru
      _
    // Predicated region
    $region6: #{tpu_custom_call.1} parent=1 // pred_check
      _
    $region7: #{tpu_custom_call.1} parent=1 // pred_check_branch
      %27 = sbr.rel (0) target = $region9
    $region8: #{tpu_custom_call.1} parent=1 // pred_region
      %s29 = ssub.s32 8192, 8192
      %30 = vsyncadd [#allocation7], %s29
      %s31 = sshll.u32 [#allocation6], 4
      %s32 = int_to_ptr.vmem [resolvable:$true] %s31
      %37 = dma.hbm_to_vmem [thread:$0]  %s1, 8192, %s32, [#allocation7], 512, 512, 32
    $region9: #{tpu_custom_call.1} parent=1 // pred_fallthru
      _
    // Predicated region
    $region10: #{tpu_custom_call.1} parent=1 // pred_check
      _
    $region11: #{tpu_custom_call.1} parent=1 // pred_check_branch
      %39 = sbr.rel (0) target = $region13
    $region12: #{tpu_custom_call.1} parent=1 // pred_region
      %s41 = ssub.s32 64, 64
      %42 = vsyncadd [#allocation7], %s41
      %s44 = sshll.u32 [#allocation8], 4
      %s45 = int_to_ptr.vmem [resolvable:$true] %s44
      %47 = dma.hbm_to_vmem [thread:$0]  %s2, 64, %s45, [#allocation7]
    $region13: #{tpu_custom_call.1} parent=1 // pred_fallthru
      _
    // Predicated region
    $region14: #{tpu_custom_call.1} parent=1 // pred_check
      _
    $region15: #{tpu_custom_call.1} parent=1 // pred_check_branch
      %49 = sbr.rel (0) target = $region17
    $region16: #{tpu_custom_call.1} parent=1 // pred_region
      %s51 = ssub.s32 8192, 8192
      %52 = vsyncadd [#allocation10], %s51
      %s53 = sshll.u32 [#allocation9], 4
      %s54 = int_to_ptr.vmem [resolvable:$true] %s53
      %59 = dma.hbm_to_vmem [thread:$0]  %s3, 8192, %s54, [#allocation10], 128, 128, 8
    $region17: #{tpu_custom_call.1} parent=1 // pred_fallthru
      _
    // Predicated region
    $region18: #{tpu_custom_call.1} parent=1 // pred_check
      _
    $region19: #{tpu_custom_call.1} parent=1 // pred_check_branch
      %61 = sbr.rel (0) target = $region21
    $region20: #{tpu_custom_call.1} parent=1 // pred_region
      _
    $region21: #{tpu_custom_call.1} parent=1 // pred_fallthru
      _
    // Predicated region
    $region22: #{tpu_custom_call.1} parent=1 // pred_check
      _
    $region23: #{tpu_custom_call.1} parent=1 // pred_check_branch
      %63 = sbr.rel (0) target = $region25
    $region24: #{tpu_custom_call.1} parent=1 // pred_region
      %64 = dma.done [#allocation4], 256
    $region25: #{tpu_custom_call.1} parent=1 // pred_fallthru
      _
    // Predicated region
    $region26: #{tpu_custom_call.1} parent=1 // pred_check
      _
    $region27: #{tpu_custom_call.1} parent=1 // pred_check_branch
      %66 = sbr.rel (0) target = $region29
    $region28: #{tpu_custom_call.1} parent=1 // pred_region
      %67 = dma.done [#allocation7], 8192
    $region29: #{tpu_custom_call.1} parent=1 // pred_fallthru
      _
    // Predicated region
    $region30: #{tpu_custom_call.1} parent=1 // pred_check
      _
    $region31: #{tpu_custom_call.1} parent=1 // pred_check_branch
      %69 = sbr.rel (0) target = $region33
    $region32: #{tpu_custom_call.1} parent=1 // pred_region
      %70 = dma.done [#allocation7], 64
    $region33: #{tpu_custom_call.1} parent=1 // pred_fallthru
      _
    // Predicated region
    $region34: #{tpu_custom_call.1} parent=1 // pred_check
      _
    $region35: #{tpu_custom_call.1} parent=1 // pred_check_branch
      %72 = sbr.rel (0) target = $region37
    $region36: #{tpu_custom_call.1} parent=1 // pred_region
      %73 = dma.done [#allocation10], 8192
    $region37: #{tpu_custom_call.1} parent=1 // pred_fallthru
      _
    %p74 = scmp.eq.s32.totalorder 0, 0
    // Predicated region
    $region38: #{tpu_custom_call.1} parent=1 // pred_check
      %p75 = pneg %p74
    $region39: #{tpu_custom_call.1} parent=1 // pred_check_branch
      %77 = sbr.rel (%p75) target = $region41
    $region40: #{tpu_custom_call.1} parent=1 // pred_region
      %78 = vst [vmem:[#allocation2] sm:$0xff] 0.0
      %79 = vst [vmem:[#allocation2 + $0x8] sm:$0xff] 0.0
    $region41: #{tpu_custom_call.1} parent=1 // pred_fallthru
      _
    %v80 = vld [vmem:[#allocation3] sm:$0xff]
    %v81 = vld [vmem:[#allocation3 + $0x8] sm:$0xff]
    %v82 = vld [vmem:[#allocation6] sm:$0xff]
    %v83 = vld [vmem:[#allocation6 + $0x8] sm:$0xff]
    %v84 = vld [vmem:[#allocation6 + $0x10] sm:$0xff]
    %v85 = vld [vmem:[#allocation6 + $0x18] sm:$0xff]
    %v86 = vld [vmem:[#allocation6 + $0x20] sm:$0xff]
    %v87 = vld [vmem:[#allocation6 + $0x28] sm:$0xff]
    %v88 = vld [vmem:[#allocation6 + $0x30] sm:$0xff]
    %v89 = vld [vmem:[#allocation6 + $0x38] sm:$0xff]
    %v90 = vld [vmem:[#allocation6 + $0x40] sm:$0xff]
    %v91 = vld [vmem:[#allocation6 + $0x48] sm:$0xff]
    %v92 = vld [vmem:[#allocation6 + $0x50] sm:$0xff]
    %v93 = vld [vmem:[#allocation6 + $0x58] sm:$0xff]
    %v94 = vld [vmem:[#allocation6 + $0x60] sm:$0xff]
    %v95 = vld [vmem:[#allocation6 + $0x68] sm:$0xff]
    %v96 = vld [vmem:[#allocation6 + $0x70] sm:$0xff]
    %v97 = vld [vmem:[#allocation6 + $0x78] sm:$0xff]
    %v98 = vld [vmem:[#allocation6 + $0x80] sm:$0xff]
    %v99 = vld [vmem:[#allocation6 + $0x88] sm:$0xff]
    %v100 = vld [vmem:[#allocation6 + $0x90] sm:$0xff]
    %v101 = vld [vmem:[#allocation6 + $0x98] sm:$0xff]
    %v102 = vld [vmem:[#allocation6 + $0xa0] sm:$0xff]
    %v103 = vld [vmem:[#allocation6 + $0xa8] sm:$0xff]
    %v104 = vld [vmem:[#allocation6 + $0xb0] sm:$0xff]
    %v105 = vld [vmem:[#allocation6 + $0xb8] sm:$0xff]
    %v106 = vld [vmem:[#allocation6 + $0xc0] sm:$0xff]
    %v107 = vld [vmem:[#allocation6 + $0xc8] sm:$0xff]
    %v108 = vld [vmem:[#allocation6 + $0xd0] sm:$0xff]
    %v109 = vld [vmem:[#allocation6 + $0xd8] sm:$0xff]
    %v110 = vld [vmem:[#allocation6 + $0xe0] sm:$0xff]
    %v111 = vld [vmem:[#allocation6 + $0xe8] sm:$0xff]
    %v112 = vld [vmem:[#allocation6 + $0xf0] sm:$0xff]
    %v113 = vld [vmem:[#allocation6 + $0xf8] sm:$0xff]
    %v114 = vld [vmem:[#allocation6 + $0x100] sm:$0xff]
    %v115 = vld [vmem:[#allocation6 + $0x108] sm:$0xff]
    %v116 = vld [vmem:[#allocation6 + $0x110] sm:$0xff]
    %v117 = vld [vmem:[#allocation6 + $0x118] sm:$0xff]
    %v118 = vld [vmem:[#allocation6 + $0x120] sm:$0xff]
    %v119 = vld [vmem:[#allocation6 + $0x128] sm:$0xff]
    %v120 = vld [vmem:[#allocation6 + $0x130] sm:$0xff]
    %v121 = vld [vmem:[#allocation6 + $0x138] sm:$0xff]
    %v122 = vld [vmem:[#allocation6 + $0x140] sm:$0xff]
    %v123 = vld [vmem:[#allocation6 + $0x148] sm:$0xff]
    %v124 = vld [vmem:[#allocation6 + $0x150] sm:$0xff]
    %v125 = vld [vmem:[#allocation6 + $0x158] sm:$0xff]
    %v126 = vld [vmem:[#allocation6 + $0x160] sm:$0xff]
    %v127 = vld [vmem:[#allocation6 + $0x168] sm:$0xff]
    %v128 = vld [vmem:[#allocation6 + $0x170] sm:$0xff]
    %v129 = vld [vmem:[#allocation6 + $0x178] sm:$0xff]
    %v130 = vld [vmem:[#allocation6 + $0x180] sm:$0xff]
    %v131 = vld [vmem:[#allocation6 + $0x188] sm:$0xff]
    %v132 = vld [vmem:[#allocation6 + $0x190] sm:$0xff]
    %v133 = vld [vmem:[#allocation6 + $0x198] sm:$0xff]
    %v134 = vld [vmem:[#allocation6 + $0x1a0] sm:$0xff]
    %v135 = vld [vmem:[#allocation6 + $0x1a8] sm:$0xff]
    %v136 = vld [vmem:[#allocation6 + $0x1b0] sm:$0xff]
    %v137 = vld [vmem:[#allocation6 + $0x1b8] sm:$0xff]
    %v138 = vld [vmem:[#allocation6 + $0x1c0] sm:$0xff]
    %v139 = vld [vmem:[#allocation6 + $0x1c8] sm:$0xff]
    %v140 = vld [vmem:[#allocation6 + $0x1d0] sm:$0xff]
    %v141 = vld [vmem:[#allocation6 + $0x1d8] sm:$0xff]
    %v142 = vld [vmem:[#allocation6 + $0x1e0] sm:$0xff]
    %v143 = vld [vmem:[#allocation6 + $0x1e8] sm:$0xff]
    %v144 = vld [vmem:[#allocation6 + $0x1f0] sm:$0xff]
    %v145 = vld [vmem:[#allocation6 + $0x1f8] sm:$0xff]
    %s146 = smul.u32 0, 512
    %s147 = sshra.s32 %s146, 7
    %s148 = sand.u32 %s146, 127
    %s149 = scalar_lea.vmem [#allocation8], %s147
    %v150 = vld [vmem:[%s149] sm:$0xf]
    %v152 = vlaneseq
    %v153 = vshrl.u32 %v152, 7
    %v154 = vsub.s32 0, %v153
    %v155 = vrot.slane %v150, %v154
    %v156 = vlaneseq
    %v157 = vshrl.u32 %v156, 7
    %v158 = vsub.s32 1, %v157
    %v159 = vrot.slane %v150, %v158
    %v160 = vlaneseq
    %v161 = vshrl.u32 %v160, 7
    %v162 = vsub.s32 2, %v161
    %v163 = vrot.slane %v150, %v162
    %v164 = vlaneseq
    %v165 = vshrl.u32 %v164, 7
    %v166 = vsub.s32 3, %v165
    %v167 = vrot.slane %v150, %v166
    %172 = vmatprep.subr.mxu0 %v143
    %173 = vmatpush1.msra.mxu0 %v142
    %174 = vmatprep.subr.mxu0 %v139
    %175 = vmatpush1.msra.mxu0 %v138
    %176 = vmatprep.subr.mxu0 %v135
    %177 = vmatpush1.msra.mxu0 %v134
    %178 = vmatprep.subr.mxu0 %v131
    %179 = vmatpush1.msra.mxu0 %v130
    %180 = vmatprep.subr.mxu0 %v127
    %181 = vmatpush1.msra.mxu0 %v126
    %182 = vmatprep.subr.mxu0 %v123
    %183 = vmatpush1.msra.mxu0 %v122
    %184 = vmatprep.subr.mxu0 %v119
    %185 = vmatpush1.msra.mxu0 %v118
    %186 = vmatprep.subr.mxu0 %v115
    %187 = vmatpush1.msra.mxu0 %v114
    %188 = vmatprep.subr.mxu0 %v111
    %189 = vmatpush1.msra.mxu0 %v110
    %190 = vmatprep.subr.mxu0 %v107
    %191 = vmatpush1.msra.mxu0 %v106
    %192 = vmatprep.subr.mxu0 %v103
    %193 = vmatpush1.msra.mxu0 %v102
    %194 = vmatprep.subr.mxu0 %v99
    %195 = vmatpush1.msra.mxu0 %v98
    %196 = vmatprep.subr.mxu0 %v95
    %197 = vmatpush1.msra.mxu0 %v94
    %198 = vmatprep.subr.mxu0 %v91
    %199 = vmatpush1.msra.mxu0 %v90
    %200 = vmatprep.subr.mxu0 %v87
    %201 = vmatpush1.msra.mxu0 %v86
    %202 = vmatprep.subr.mxu0 %v83
    %203 = vmatpush1.msra.mxu0 %v82
    %204 = vmatprep.subr.mxu0 0.0
    %205 = vmatpush2.msra.mxu0 0.0
    %206 = vmatprep.subr.mxu0 0.0
    %207 = vmatpush2.msra.mxu0 0.0
    %208 = vmatprep.subr.mxu0 0.0
    %209 = vmatpush2.msra.mxu0 0.0
    %210 = vmatprep.subr.mxu0 0.0
    %211 = vmatpush2.msra.mxu0 0.0
    %212 = vmatprep.subr.mxu0 0.0
    %213 = vmatpush2.msra.mxu0 0.0
    %214 = vmatprep.subr.mxu0 0.0
    %215 = vmatpush2.msra.mxu0 0.0
    %216 = vmatprep.subr.mxu0 0.0
    %217 = vmatpush2.msra.mxu0 0.0
    %218 = vmatprep.subr.mxu0 0.0
    %219 = vmatpush2.msra.mxu0 0.0
    %220 = vmatprep.subr.mxu0 0.0
    %221 = vmatpush2.msra.mxu0 0.0
    %222 = vmatprep.subr.mxu0 0.0
    %223 = vmatpush2.msra.mxu0 0.0
    %224 = vmatprep.subr.mxu0 0.0
    %225 = vmatpush2.msra.mxu0 0.0
    %226 = vmatprep.subr.mxu0 0.0
    %227 = vmatpush2.msra.mxu0 0.0
    %228 = vmatprep.subr.mxu0 0.0
    %229 = vmatpush2.msra.mxu0 0.0
    %230 = vmatprep.subr.mxu0 0.0
    %231 = vmatpush2.msra.mxu0 0.0
    %232 = vmatprep.subr.mxu0 0.0
    %233 = vmatpush2.msra.mxu0 0.0
    %234 = vmatprep.subr.mxu0 0.0
    %235 = vmatpush2.msra.mxu0 0.0
    %236 = vmatprep.mubr.f32.mxu0 0.0
    %237 = vmatmul.mubr.f32.gmra.mxu0 %v80
    %v238 = vpop.f32.mrf.mxu0
    %v239 = vadd.f32 %v155, %v238
    %v240 = vpop.f32.mrf.mxu0
    %v241 = vadd.f32 %v159, %v240
    %242 = vmatprep.mubr.f32.mxu0 0.0
    %243 = vmatmul.mubr.f32.gmra.mxu0 %v81
    %v244 = vpop.f32.mrf.mxu0
    %v245 = vadd.f32 %v155, %v244
    %v246 = vpop.f32.mrf.mxu0
    %v247 = vadd.f32 %v159, %v246
    %248 = vdwg.mxu0
    %249 = vmatprep.subr.mxu0 %v145
    %250 = vmatpush1.msra.mxu0 %v144
    %251 = vmatprep.subr.mxu0 %v141
    %252 = vmatpush1.msra.mxu0 %v140
    %253 = vmatprep.subr.mxu0 %v137
    %254 = vmatpush1.msra.mxu0 %v136
    %255 = vmatprep.subr.mxu0 %v133
    %256 = vmatpush1.msra.mxu0 %v132
    %257 = vmatprep.subr.mxu0 %v129
    %258 = vmatpush1.msra.mxu0 %v128
    %259 = vmatprep.subr.mxu0 %v125
    %260 = vmatpush1.msra.mxu0 %v124
    %261 = vmatprep.subr.mxu0 %v121
    %262 = vmatpush1.msra.mxu0 %v120
    %263 = vmatprep.subr.mxu0 %v117
    %264 = vmatpush1.msra.mxu0 %v116
    %265 = vmatprep.subr.mxu0 %v113
    %266 = vmatpush1.msra.mxu0 %v112
    %267 = vmatprep.subr.mxu0 %v109
    %268 = vmatpush1.msra.mxu0 %v108
    %269 = vmatprep.subr.mxu0 %v105
    %270 = vmatpush1.msra.mxu0 %v104
    %271 = vmatprep.subr.mxu0 %v101
    %272 = vmatpush1.msra.mxu0 %v100
    %273 = vmatprep.subr.mxu0 %v97
    %274 = vmatpush1.msra.mxu0 %v96
    %275 = vmatprep.subr.mxu0 %v93
    %276 = vmatpush1.msra.mxu0 %v92
    %277 = vmatprep.subr.mxu0 %v89
    %278 = vmatpush1.msra.mxu0 %v88
    %279 = vmatprep.subr.mxu0 %v85
    %280 = vmatpush1.msra.mxu0 %v84
    %281 = vmatprep.subr.mxu0 0.0
    %282 = vmatpush2.msra.mxu0 0.0
    %283 = vmatprep.subr.mxu0 0.0
    %284 = vmatpush2.msra.mxu0 0.0
    %285 = vmatprep.subr.mxu0 0.0
    %286 = vmatpush2.msra.mxu0 0.0
    %287 = vmatprep.subr.mxu0 0.0
    %288 = vmatpush2.msra.mxu0 0.0
    %289 = vmatprep.subr.mxu0 0.0
    %290 = vmatpush2.msra.mxu0 0.0
    %291 = vmatprep.subr.mxu0 0.0
    %292 = vmatpush2.msra.mxu0 0.0
    %293 = vmatprep.subr.mxu0 0.0
    %294 = vmatpush2.msra.mxu0 0.0
    %295 = vmatprep.subr.mxu0 0.0
    %296 = vmatpush2.msra.mxu0 0.0
    %297 = vmatprep.subr.mxu0 0.0
    %298 = vmatpush2.msra.mxu0 0.0
    %299 = vmatprep.subr.mxu0 0.0
    %300 = vmatpush2.msra.mxu0 0.0
    %301 = vmatprep.subr.mxu0 0.0
    %302 = vmatpush2.msra.mxu0 0.0
    %303 = vmatprep.subr.mxu0 0.0
    %304 = vmatpush2.msra.mxu0 0.0
    %305 = vmatprep.subr.mxu0 0.0
    %306 = vmatpush2.msra.mxu0 0.0
    %307 = vmatprep.subr.mxu0 0.0
    %308 = vmatpush2.msra.mxu0 0.0
    %309 = vmatprep.subr.mxu0 0.0
    %310 = vmatpush2.msra.mxu0 0.0
    %311 = vmatprep.subr.mxu0 0.0
    %312 = vmatpush2.msra.mxu0 0.0
    %313 = vmatprep.mubr.f32.mxu0 0.0
    %314 = vmatmul.mubr.f32.gmra.mxu0 %v80
    %v315 = vpop.f32.mrf.mxu0
    %v316 = vadd.f32 %v163, %v315
    %v317 = vpop.f32.mrf.mxu0
    %v318 = vadd.f32 %v167, %v317
    %319 = vmatprep.mubr.f32.mxu0 0.0
    %320 = vmatmul.mubr.f32.gmra.mxu0 %v81
    %v321 = vpop.f32.mrf.mxu0
    %v322 = vadd.f32 %v163, %v321
    %v323 = vpop.f32.mrf.mxu0
    %v324 = vadd.f32 %v167, %v323
    %325 = vdwg.mxu0
    %v326 = vmul.f32 %v239, 0.5
    %v327 = vmul.f32 %v241, 0.5
    %v328 = vmul.f32 %v316, 0.5
    %v329 = vmul.f32 %v318, 0.5
    %v330 = vmul.f32 %v245, 0.5
    %v331 = vmul.f32 %v247, 0.5
    %v332 = vmul.f32 %v322, 0.5
    %v333 = vmul.f32 %v324, 0.5
    %v334 = vmul.f32 %v239, 0.7978846
    %v335 = vmul.f32 %v241, 0.7978846
    %v336 = vmul.f32 %v316, 0.7978846
    %v337 = vmul.f32 %v318, 0.7978846
    %v338 = vmul.f32 %v245, 0.7978846
    %v339 = vmul.f32 %v247, 0.7978846
    %v340 = vmul.f32 %v322, 0.7978846
    %v341 = vmul.f32 %v324, 0.7978846
    %v342 = vmul.f32 %v239, 0.044715
    %v343 = vmul.f32 %v241, 0.044715
    %v344 = vmul.f32 %v316, 0.044715
    %v345 = vmul.f32 %v318, 0.044715
    %v346 = vmul.f32 %v245, 0.044715
    %v347 = vmul.f32 %v247, 0.044715
    %v348 = vmul.f32 %v322, 0.044715
    %v349 = vmul.f32 %v324, 0.044715
    %v350 = vmul.f32 %v342, %v239
    %v351 = vmul.f32 %v343, %v241
    %v352 = vmul.f32 %v344, %v316
    %v353 = vmul.f32 %v345, %v318
    %v354 = vmul.f32 %v346, %v245
    %v355 = vmul.f32 %v347, %v247
    %v356 = vmul.f32 %v348, %v322
    %v357 = vmul.f32 %v349, %v324
    %v358 = vadd.f32 %v350, 1.0
    %v359 = vadd.f32 %v351, 1.0
    %v360 = vadd.f32 %v352, 1.0
    %v361 = vadd.f32 %v353, 1.0
    %v362 = vadd.f32 %v354, 1.0
    %v363 = vadd.f32 %v355, 1.0
    %v364 = vadd.f32 %v356, 1.0
    %v365 = vadd.f32 %v357, 1.0
    %v366 = vmul.f32 %v334, %v358
    %v367 = vmul.f32 %v335, %v359
    %v368 = vmul.f32 %v336, %v360
    %v369 = vmul.f32 %v337, %v361
    %v370 = vmul.f32 %v338, %v362
    %v371 = vmul.f32 %v339, %v363
    %v372 = vmul.f32 %v340, %v364
    %v373 = vmul.f32 %v341, %v365
    %v374 = vtanh.pop %v366
    %v375 = vtanh.pop %v367
    %v376 = vtanh.pop %v368
    %v377 = vtanh.pop %v369
    %v378 = vtanh.pop %v370
    %v379 = vtanh.pop %v371
    %v380 = vtanh.pop %v372
    %v381 = vtanh.pop %v373
    %v382 = vadd.f32 %v374, 1.0
    %v383 = vadd.f32 %v375, 1.0
    %v384 = vadd.f32 %v376, 1.0
    %v385 = vadd.f32 %v377, 1.0
    %v386 = vadd.f32 %v378, 1.0
    %v387 = vadd.f32 %v379, 1.0
    %v388 = vadd.f32 %v380, 1.0
    %v389 = vadd.f32 %v381, 1.0
    %v390 = vmul.f32 %v326, %v382
    %v391 = vmul.f32 %v327, %v383
    %v392 = vmul.f32 %v328, %v384
    %v393 = vmul.f32 %v329, %v385
    %v394 = vmul.f32 %v330, %v386
    %v395 = vmul.f32 %v331, %v387
    %v396 = vmul.f32 %v332, %v388
    %v397 = vmul.f32 %v333, %v389
    %v398 = vld [vmem:[#allocation2] sm:$0xff]
    %v399 = vld [vmem:[#allocation2 + $0x8] sm:$0xff]
    %v400 = vld [vmem:[#allocation9] sm:$0xff]
    %v401 = vld [vmem:[#allocation9 + $0x8] sm:$0xff]
    %v402 = vld [vmem:[#allocation9 + $0x10] sm:$0xff]
    %v403 = vld [vmem:[#allocation9 + $0x18] sm:$0xff]
    %v404 = vld [vmem:[#allocation9 + $0x20] sm:$0xff]
    %v405 = vld [vmem:[#allocation9 + $0x28] sm:$0xff]
    %v406 = vld [vmem:[#allocation9 + $0x30] sm:$0xff]
    %v407 = vld [vmem:[#allocation9 + $0x38] sm:$0xff]
    %v408 = vld [vmem:[#allocation9 + $0x40] sm:$0xff]
    %v409 = vld [vmem:[#allocation9 + $0x48] sm:$0xff]
    %v410 = vld [vmem:[#allocation9 + $0x50] sm:$0xff]
    %v411 = vld [vmem:[#allocation9 + $0x58] sm:$0xff]
    %v412 = vld [vmem:[#allocation9 + $0x60] sm:$0xff]
    %v413 = vld [vmem:[#allocation9 + $0x68] sm:$0xff]
    %v414 = vld [vmem:[#allocation9 + $0x70] sm:$0xff]
    %v415 = vld [vmem:[#allocation9 + $0x78] sm:$0xff]
    %v416 = vld [vmem:[#allocation9 + $0x80] sm:$0xff]
    %v417 = vld [vmem:[#allocation9 + $0x88] sm:$0xff]
    %v418 = vld [vmem:[#allocation9 + $0x90] sm:$0xff]
    %v419 = vld [vmem:[#allocation9 + $0x98] sm:$0xff]
    %v420 = vld [vmem:[#allocation9 + $0xa0] sm:$0xff]
    %v421 = vld [vmem:[#allocation9 + $0xa8] sm:$0xff]
    %v422 = vld [vmem:[#allocation9 + $0xb0] sm:$0xff]
    %v423 = vld [vmem:[#allocation9 + $0xb8] sm:$0xff]
    %v424 = vld [vmem:[#allocation9 + $0xc0] sm:$0xff]
    %v425 = vld [vmem:[#allocation9 + $0xc8] sm:$0xff]
    %v426 = vld [vmem:[#allocation9 + $0xd0] sm:$0xff]
    %v427 = vld [vmem:[#allocation9 + $0xd8] sm:$0xff]
    %v428 = vld [vmem:[#allocation9 + $0xe0] sm:$0xff]
    %v429 = vld [vmem:[#allocation9 + $0xe8] sm:$0xff]
    %v430 = vld [vmem:[#allocation9 + $0xf0] sm:$0xff]
    %v431 = vld [vmem:[#allocation9 + $0xf8] sm:$0xff]
    %v432 = vld [vmem:[#allocation9 + $0x100] sm:$0xff]
    %v433 = vld [vmem:[#allocation9 + $0x108] sm:$0xff]
    %v434 = vld [vmem:[#allocation9 + $0x110] sm:$0xff]
    %v435 = vld [vmem:[#allocation9 + $0x118] sm:$0xff]
    %v436 = vld [vmem:[#allocation9 + $0x120] sm:$0xff]
    %v437 = vld [vmem:[#allocation9 + $0x128] sm:$0xff]
    %v438 = vld [vmem:[#allocation9 + $0x130] sm:$0xff]
    %v439 = vld [vmem:[#allocation9 + $0x138] sm:$0xff]
    %v440 = vld [vmem:[#allocation9 + $0x140] sm:$0xff]
    %v441 = vld [vmem:[#allocation9 + $0x148] sm:$0xff]
    %v442 = vld [vmem:[#allocation9 + $0x150] sm:$0xff]
    %v443 = vld [vmem:[#allocation9 + $0x158] sm:$0xff]
    %v444 = vld [vmem:[#allocation9 + $0x160] sm:$0xff]
    %v445 = vld [vmem:[#allocation9 + $0x168] sm:$0xff]
    %v446 = vld [vmem:[#allocation9 + $0x170] sm:$0xff]
    %v447 = vld [vmem:[#allocation9 + $0x178] sm:$0xff]
    %v448 = vld [vmem:[#allocation9 + $0x180] sm:$0xff]
    %v449 = vld [vmem:[#allocation9 + $0x188] sm:$0xff]
    %v450 = vld [vmem:[#allocation9 + $0x190] sm:$0xff]
    %v451 = vld [vmem:[#allocation9 + $0x198] sm:$0xff]
    %v452 = vld [vmem:[#allocation9 + $0x1a0] sm:$0xff]
    %v453 = vld [vmem:[#allocation9 + $0x1a8] sm:$0xff]
    %v454 = vld [vmem:[#allocation9 + $0x1b0] sm:$0xff]
    %v455 = vld [vmem:[#allocation9 + $0x1b8] sm:$0xff]
    %v456 = vld [vmem:[#allocation9 + $0x1c0] sm:$0xff]
    %v457 = vld [vmem:[#allocation9 + $0x1c8] sm:$0xff]
    %v458 = vld [vmem:[#allocation9 + $0x1d0] sm:$0xff]
    %v459 = vld [vmem:[#allocation9 + $0x1d8] sm:$0xff]
    %v460 = vld [vmem:[#allocation9 + $0x1e0] sm:$0xff]
    %v461 = vld [vmem:[#allocation9 + $0x1e8] sm:$0xff]
    %v462 = vld [vmem:[#allocation9 + $0x1f0] sm:$0xff]
    %v463 = vld [vmem:[#allocation9 + $0x1f8] sm:$0xff]
    %464 = vmatprep.subr.mxu0 0.0
    %465 = vmatpush1.msra.mxu0 %v415
    %466 = vmatprep.subr.mxu0 0.0
    %467 = vmatpush1.msra.mxu0 %v414
    %468 = vmatprep.subr.mxu0 0.0
    %469 = vmatpush1.msra.mxu0 %v413
    %470 = vmatprep.subr.mxu0 0.0
    %471 = vmatpush1.msra.mxu0 %v412
    %472 = vmatprep.subr.mxu0 0.0
    %473 = vmatpush1.msra.mxu0 %v411
    %474 = vmatprep.subr.mxu0 0.0
    %475 = vmatpush1.msra.mxu0 %v410
    %476 = vmatprep.subr.mxu0 0.0
    %477 = vmatpush1.msra.mxu0 %v409
    %478 = vmatprep.subr.mxu0 0.0
    %479 = vmatpush1.msra.mxu0 %v408
    %480 = vmatprep.subr.mxu0 0.0
    %481 = vmatpush1.msra.mxu0 %v407
    %482 = vmatprep.subr.mxu0 0.0
    %483 = vmatpush1.msra.mxu0 %v406
    %484 = vmatprep.subr.mxu0 0.0
    %485 = vmatpush1.msra.mxu0 %v405
    %486 = vmatprep.subr.mxu0 0.0
    %487 = vmatpush1.msra.mxu0 %v404
    %488 = vmatprep.subr.mxu0 0.0
    %489 = vmatpush1.msra.mxu0 %v403
    %490 = vmatprep.subr.mxu0 0.0
    %491 = vmatpush1.msra.mxu0 %v402
    %492 = vmatprep.subr.mxu0 0.0
    %493 = vmatpush1.msra.mxu0 %v401
    %494 = vmatprep.subr.mxu0 0.0
    %495 = vmatpush1.msra.mxu0 %v400
    %496 = vmatprep.subr.mxu0 0.0
    %497 = vmatpush2.msra.mxu0 %v431
    %498 = vmatprep.subr.mxu0 0.0
    %499 = vmatpush2.msra.mxu0 %v430
    %500 = vmatprep.subr.mxu0 0.0
    %501 = vmatpush2.msra.mxu0 %v429
    %502 = vmatprep.subr.mxu0 0.0
    %503 = vmatpush2.msra.mxu0 %v428
    %504 = vmatprep.subr.mxu0 0.0
    %505 = vmatpush2.msra.mxu0 %v427
    %506 = vmatprep.subr.mxu0 0.0
    %507 = vmatpush2.msra.mxu0 %v426
    %508 = vmatprep.subr.mxu0 0.0
    %509 = vmatpush2.msra.mxu0 %v425
    %510 = vmatprep.subr.mxu0 0.0
    %511 = vmatpush2.msra.mxu0 %v424
    %512 = vmatprep.subr.mxu0 0.0
    %513 = vmatpush2.msra.mxu0 %v423
    %514 = vmatprep.subr.mxu0 0.0
    %515 = vmatpush2.msra.mxu0 %v422
    %516 = vmatprep.subr.mxu0 0.0
    %517 = vmatpush2.msra.mxu0 %v421
    %518 = vmatprep.subr.mxu0 0.0
    %519 = vmatpush2.msra.mxu0 %v420
    %520 = vmatprep.subr.mxu0 0.0
    %521 = vmatpush2.msra.mxu0 %v419
    %522 = vmatprep.subr.mxu0 0.0
    %523 = vmatpush2.msra.mxu0 %v418
    %524 = vmatprep.subr.mxu0 0.0
    %525 = vmatpush2.msra.mxu0 %v417
    %526 = vmatprep.subr.mxu0 0.0
    %527 = vmatpush2.msra.mxu0 %v416
    %528 = vmatprep.mubr.f32.mxu0 %v391
    %529 = vmatmul.mubr.f32.gmra.mxu0 %v390
    %v530 = vpop.f32.mrf.mxu0
    %v531 = vadd.f32 0.0, %v530
    %v532 = vpop.f32.mrf.mxu0
    %533 = vmatprep.mubr.f32.mxu0 %v395
    %534 = vmatmul.mubr.f32.gmra.mxu0 %v394
    %v535 = vpop.f32.mrf.mxu0
    %v536 = vadd.f32 0.0, %v535
    %v537 = vpop.f32.mrf.mxu0
    %538 = vdwg.mxu0
    %539 = vmatprep.subr.mxu0 0.0
    %540 = vmatpush1.msra.mxu0 %v447
    %541 = vmatprep.subr.mxu0 0.0
    %542 = vmatpush1.msra.mxu0 %v446
    %543 = vmatprep.subr.mxu0 0.0
    %544 = vmatpush1.msra.mxu0 %v445
    %545 = vmatprep.subr.mxu0 0.0
    %546 = vmatpush1.msra.mxu0 %v444
    %547 = vmatprep.subr.mxu0 0.0
    %548 = vmatpush1.msra.mxu0 %v443
    %549 = vmatprep.subr.mxu0 0.0
    %550 = vmatpush1.msra.mxu0 %v442
    %551 = vmatprep.subr.mxu0 0.0
    %552 = vmatpush1.msra.mxu0 %v441
    %553 = vmatprep.subr.mxu0 0.0
    %554 = vmatpush1.msra.mxu0 %v440
    %555 = vmatprep.subr.mxu0 0.0
    %556 = vmatpush1.msra.mxu0 %v439
    %557 = vmatprep.subr.mxu0 0.0
    %558 = vmatpush1.msra.mxu0 %v438
    %559 = vmatprep.subr.mxu0 0.0
    %560 = vmatpush1.msra.mxu0 %v437
    %561 = vmatprep.subr.mxu0 0.0
    %562 = vmatpush1.msra.mxu0 %v436
    %563 = vmatprep.subr.mxu0 0.0
    %564 = vmatpush1.msra.mxu0 %v435
    %565 = vmatprep.subr.mxu0 0.0
    %566 = vmatpush1.msra.mxu0 %v434
    %567 = vmatprep.subr.mxu0 0.0
    %568 = vmatpush1.msra.mxu0 %v433
    %569 = vmatprep.subr.mxu0 0.0
    %570 = vmatpush1.msra.mxu0 %v432
    %571 = vmatprep.subr.mxu0 0.0
    %572 = vmatpush2.msra.mxu0 %v463
    %573 = vmatprep.subr.mxu0 0.0
    %574 = vmatpush2.msra.mxu0 %v462
    %575 = vmatprep.subr.mxu0 0.0
    %576 = vmatpush2.msra.mxu0 %v461
    %577 = vmatprep.subr.mxu0 0.0
    %578 = vmatpush2.msra.mxu0 %v460
    %579 = vmatprep.subr.mxu0 0.0
    %580 = vmatpush2.msra.mxu0 %v459
    %581 = vmatprep.subr.mxu0 0.0
    %582 = vmatpush2.msra.mxu0 %v458
    %583 = vmatprep.subr.mxu0 0.0
    %584 = vmatpush2.msra.mxu0 %v457
    %585 = vmatprep.subr.mxu0 0.0
    %586 = vmatpush2.msra.mxu0 %v456
    %587 = vmatprep.subr.mxu0 0.0
    %588 = vmatpush2.msra.mxu0 %v455
    %589 = vmatprep.subr.mxu0 0.0
    %590 = vmatpush2.msra.mxu0 %v454
    %591 = vmatprep.subr.mxu0 0.0
    %592 = vmatpush2.msra.mxu0 %v453
    %593 = vmatprep.subr.mxu0 0.0
    %594 = vmatpush2.msra.mxu0 %v452
    %595 = vmatprep.subr.mxu0 0.0
    %596 = vmatpush2.msra.mxu0 %v451
    %597 = vmatprep.subr.mxu0 0.0
    %598 = vmatpush2.msra.mxu0 %v450
    %599 = vmatprep.subr.mxu0 0.0
    %600 = vmatpush2.msra.mxu0 %v449
    %601 = vmatprep.subr.mxu0 0.0
    %602 = vmatpush2.msra.mxu0 %v448
    %603 = vmatprep.mubr.f32.mxu0 %v393
    %604 = vmatmul.mubr.f32.gmra.mxu0 %v392
    %v605 = vpop.f32.mrf.mxu0
    %v606 = vadd.f32 %v531, %v605
    %v607 = vpop.f32.mrf.mxu0
    %608 = vmatprep.mubr.f32.mxu0 %v397
    %609 = vmatmul.mubr.f32.gmra.mxu0 %v396
    %v610 = vpop.f32.mrf.mxu0
    %v611 = vadd.f32 %v536, %v610
    %v612 = vpop.f32.mrf.mxu0
    %613 = vdwg.mxu0
    %v614 = vadd.f32 %v398, %v606
    %v615 = vadd.f32 %v399, %v611
    %616 = vst [vmem:[#allocation2] sm:$0xff] %v614
    %617 = vst [vmem:[#allocation2 + $0x8] sm:$0xff] %v615
    // Predicated region
    $region42: #{tpu_custom_call.1} parent=1 // pred_check
      %p618 = pneg %p74
    $region43: #{tpu_custom_call.1} parent=1 // pred_check_branch
      %620 = sbr.rel (%p618) target = $region45
    $region44: #{tpu_custom_call.1} parent=1 // pred_region
      %v621 = vld [vmem:[#allocation2] sm:$0xff]
      %v622 = vld [vmem:[#allocation2 + $0x8] sm:$0xff]
      %v623 = vld [vmem:[%s4] sm:$0x1]
      %v625 = vlaneseq
      %v626 = vshrl.u32 %v625, 7
      %v627 = vsub.s32 0, %v626
      %v628 = vrot.slane %v623, %v627
      %v630 = vadd.f32 %v621, %v628
      %v631 = vadd.f32 %v622, %v628
      %632 = vst [vmem:[#allocation11] sm:$0xff] %v630
      %633 = vst [vmem:[#allocation11 + $0x8] sm:$0xff] %v631
    $region45: #{tpu_custom_call.1} parent=1 // pred_fallthru
      _
    // Predicated region
    $region46: #{tpu_custom_call.1} parent=1 // pred_check
      _
    $region47: #{tpu_custom_call.1} parent=1 // pred_check_branch
      %635 = sbr.rel (0) target = $region49
    $region48: #{tpu_custom_call.1} parent=1 // pred_region
      %s637 = ssub.s32 256, 256
      %638 = vsyncadd [#allocation5], %s637
      %s639 = sshll.u32 [#allocation11], 4
      %s640 = int_to_ptr.vmem [resolvable:$true] %s639
      %645 = dma.vmem_to_hbm [thread:$0]  %s640, 256, %s5, [#allocation5], 128, 128, 8
    $region49: #{tpu_custom_call.1} parent=1 // pred_fallthru
      _
    // Predicated region
    $region50: #{tpu_custom_call.1} parent=1 // pred_check
      _
    $region51: #{tpu_custom_call.1} parent=1 // pred_check_branch
      %647 = sbr.rel (0) target = $region53
    $region52: #{tpu_custom_call.1} parent=1 // pred_region
      %648 = dma.done [#allocation5], 256
    $region53: #{tpu_custom_call.1} parent=1 // pred_fallthru
      _
    %649 = vsyncpa [#allocation4], 1
    %650 = vsyncpa [#allocation7], 1
    %651 = vsyncpa [#allocation10], 1
    %652 = vsyncpa [#allocation5], 1

</llo_original>
